<compile_context>
chip_gen: v5e
topology: v5e:2x2
jax: 0.10.0
libtpu: 0.0.40
codegen_flags: <defaults>
</compile_context>

<pallas_src>
import math

import jax
import jax.numpy as jnp
from jax.experimental import pallas as pl
from jax.experimental.pallas import tpu as pltpu


def _round_up(v, m):
    return ((v + m - 1) // m) * m


def _sublane_multiple(dtype):
    return {4: 8, 2: 16, 1: 32}[jnp.dtype(dtype).itemsize]


def _footprint_bytes(tm, tn, tk, rank_pad, elt):
    # Double-buffered inputs/outputs + f32 accumulator scratch.
    dbl = 2 * elt * (tm * tk + tk * tn + tn + tm * rank_pad + rank_pad * tn
                     + tm * tn)
    return dbl + 4 * tm * tn


def _choose_kn_tiles(in_dim, out_dim, rank, dtype,
                     vmem_budget=24 * 1024 * 1024, tm_max=512):
    """Pick (tn, tk, rank_pad): largest lane-dense tiles fitting the budget."""
    elt = jnp.dtype(dtype).itemsize
    rank_pad = _round_up(rank, 128)
    tn_cap = min(512, _round_up(out_dim, 128))
    tk_cap = min(2048, _round_up(in_dim, 128))
    tn_candidates = [t for t in (512, 256, 128) if t <= tn_cap] or [tn_cap]
    tk_candidates = [t for t in (2048, 1024, 512, 256, 128) if t <= tk_cap] or [tk_cap]
    for tn in tn_candidates:
        for tk in tk_candidates:
            if _footprint_bytes(tm_max, tn, tk, rank_pad, elt) <= vmem_budget:
                return tn, tk, rank_pad
    return tn_candidates[-1], tk_candidates[-1], rank_pad


def _linear_lora_kernel(x_ref, wt_ref, b_ref, xa_ref, bm_ref, o_ref, acc_ref):
    """One (i, j, k) grid step.

    x_ref  : (tm, tk)          x tile
    wt_ref : (tk, tn)          W^T tile (pre-transposed once at prepare time)
    b_ref  : (1, tn)           bias tile
    xa_ref : (tm, rank_pad)    precomputed x @ A tile (k-invariant, stays resident)
    bm_ref : (rank_pad, tn)    alpha * B tile (k-invariant, stays resident)
    o_ref  : (tm, tn)          output tile
    acc_ref: (tm, tn) f32      accumulator, persists across the K sweep
    """
    k = pl.program_id(2)
    nk = pl.num_programs(2)

    @pl.when(k == 0)
    def _init():
        # Fold bias + LoRA second stage into the accumulator init so the
        # finalize epilogue is just a cast + unmasked store.
        lora = jnp.dot(xa_ref[...], bm_ref[...],
                       preferred_element_type=jnp.float32)
        acc_ref[...] = lora + b_ref[...].astype(jnp.float32)

    acc_ref[...] += jnp.dot(x_ref[...], wt_ref[...],
                            preferred_element_type=jnp.float32)

    @pl.when(k == nk - 1)
    def _finalize():
        o_ref[...] = acc_ref[...].astype(o_ref.dtype)


def prepare_lora_linear(w, b, A, B, alpha):
    """Pad / pre-transpose the static parameters ONCE (not per forward).

    w: (out_dim, in_dim); b: (out_dim,); A: (in_dim, rank); B: (rank, out_dim).
    Params may be bf16 for halved HBM traffic; accumulation stays f32 in-kernel.
    """
    out_dim, in_dim = w.shape
    rank = A.shape[1]
    dtype = w.dtype

    tn, tk, rank_pad = _choose_kn_tiles(in_dim, out_dim, rank, dtype)
    K_pad = _round_up(in_dim, tk)
    N_pad = _round_up(out_dim, tn)

    wt_p = jnp.pad(w.T, ((0, K_pad - in_dim), (0, N_pad - out_dim)))
    b_p = jnp.pad(b.reshape(1, out_dim), ((0, 0), (0, N_pad - out_dim)))
    a_p = jnp.pad(A, ((0, K_pad - in_dim), (0, rank_pad - rank)))
    bm_p = jnp.pad(jnp.asarray(alpha, A.dtype) * B,   # alpha folded into B
                   ((0, rank_pad - rank), (0, N_pad - out_dim)))

    return dict(in_dim=in_dim, out_dim=out_dim, rank_pad=rank_pad,
                tn=tn, tk=tk, K_pad=K_pad, N_pad=N_pad,
                wt_p=wt_p, b_p=b_p, a_p=a_p, bm_p=bm_p)


def linear_with_lora(x, params):
    """x: (..., in_dim) -> (..., out_dim)."""
    in_dim = params["in_dim"]
    out_dim = params["out_dim"]
    tn, tk, rank_pad = params["tn"], params["tk"], params["rank_pad"]
    K_pad, N_pad = params["K_pad"], params["N_pad"]
    assert x.shape[-1] == in_dim

    lead_shape = x.shape[:-1]
    M = int(math.prod(lead_shape)) if lead_shape else 1

    sub = _sublane_multiple(x.dtype)
    tm = min(512, _round_up(M, sub))
    M_pad = _round_up(M, tm)

    x2d = jnp.pad(x.reshape(M, in_dim),
                  ((0, M_pad - M), (0, K_pad - in_dim)))

    # LoRA first stage hoisted out of the kernel: one tiny (M, K) @ (K, r)
    # matmul; avoids the kernel re-DMAing A on every (i, j, k) step and lets
    # the N grid axis be core-parallel.
    xa = jnp.dot(x2d, params["a_p"],
                 preferred_element_type=jnp.float32).astype(x.dtype)

    grid = (M_pad // tm, N_pad // tn, K_pad // tk)

    elt = jnp.dtype(x.dtype).itemsize
    buf_bytes = _footprint_bytes(tm, tn, tk, rank_pad, elt)
    vmem_limit = int(min(max(int(1.5 * buf_bytes), 16 * 1024 * 1024),
                         48 * 1024 * 1024))

    out2d = pl.pallas_call(
        _linear_lora_kernel,
        out_shape=jax.ShapeDtypeStruct((M_pad, N_pad), x.dtype),
        grid_spec=pltpu.PrefetchScalarGridSpec(
            num_scalar_prefetch=0,
            grid=grid,
            in_specs=[
                pl.BlockSpec((tm, tk), lambda i, j, k: (i, k)),         # x
                pl.BlockSpec((tk, tn), lambda i, j, k: (k, j)),         # W^T
                pl.BlockSpec((1, tn), lambda i, j, k: (0, j)),          # bias
                pl.BlockSpec((tm, rank_pad), lambda i, j, k: (i, 0)),   # x @ A
                pl.BlockSpec((rank_pad, tn), lambda i, j, k: (0, j)),   # alpha*B
            ],
            out_specs=pl.BlockSpec((tm, tn), lambda i, j, k: (i, j)),
            scratch_shapes=[
                pltpu.VMEM((tm, tn), jnp.float32),   # f32 accumulator
            ]),
        compiler_params=pltpu.CompilerParams(
            dimension_semantics=("parallel", "parallel", "arbitrary"),
            vmem_limit_bytes=vmem_limit),
    )(x2d, params["wt_p"], params["b_p"], xa, params["bm_p"])

    return out2d[:M, :out_dim].reshape(*lead_shape, out_dim)


def _kaiming_uniform(key, shape, fan_in, a=math.sqrt(5)):
    # Matches torch.nn.init.kaiming_uniform_(a=sqrt(5)) bound computation.
    gain = math.sqrt(2.0 / (1.0 + a * a))
    bound = gain * math.sqrt(3.0 / fan_in)
    return jax.random.uniform(key, shape, jnp.float32, -bound, bound)


if __name__ == "__main__":
    # Small shapes consistent with the module's forward.
    batch, seq, in_dim, out_dim, rank, alpha = 2, 8, 32, 64, 4, 16.0

    key = jax.random.PRNGKey(0)
    kx, kw, kb, ka, kb2 = jax.random.split(key, 5)

    x = jax.random.normal(kx, (batch, seq, in_dim), jnp.float32)

    # nn.Linear params: weight (out_dim, in_dim), bias (out_dim,)
    w = _kaiming_uniform(kw, (out_dim, in_dim), fan_in=in_dim)
    b_bound = 1.0 / math.sqrt(in_dim)
    b = jax.random.uniform(kb, (out_dim,), jnp.float32, -b_bound, b_bound)

    # LoRa params: A kaiming-uniform, B zeros (module init). Also check a
    # non-zero B so the LoRA path is exercised numerically.
    A = _kaiming_uniform(ka, (in_dim, rank), fan_in=in_dim)
    B_init = jnp.zeros((rank, out_dim), jnp.float32)
    B_rand = 0.1 * jax.random.normal(kb2, (rank, out_dim), jnp.float32)

    ok = True
    for B in (B_init, B_rand):
        params = prepare_lora_linear(w, b, A, B, alpha)   # one-time prep
        out = linear_with_lora(x, params)
        out = jax.block_until_ready(out)
        ref = x @ w.T + b + alpha * ((x @ A) @ B)
        ok &= out.shape == (batch, seq, out_dim)
        ok &= bool(jnp.allclose(out, ref, atol=1e-4, rtol=1e-4))
    assert ok, "mismatch vs reference"

    print("KERNEL_OK")
</pallas_src>

<mosaic_0001>
module attributes {stable_mosaic.version = 11 : i64} {
  func.func @_linear_lora_kernel(%arg0: i32, %arg1: i32, %arg2: i32, %arg3: memref<16x128xf32, #tpu.memory_space<vmem>>, %arg4: memref<128x128xf32, #tpu.memory_space<vmem>>, %arg5: memref<1x128xf32, #tpu.memory_space<vmem>>, %arg6: memref<16x128xf32, #tpu.memory_space<vmem>>, %arg7: memref<128x128xf32, #tpu.memory_space<vmem>>, %arg8: memref<16x128xf32, #tpu.memory_space<vmem>>, %arg9: memref<16x128xf32, #tpu.memory_space<vmem>>) attributes {dimension_semantics = [#tpu.dimension_semantics<parallel>, #tpu.dimension_semantics<parallel>, #tpu.dimension_semantics<arbitrary>], iteration_bounds = array<i64: 1, 1, 1>, scalar_prefetch = 0 : i64, scratch_operands = 1 : i64, tpu.core_type = #tpu.core_type<tc>, window_params = [{transform_indices = @transform_0, window_bounds = array<i64: 16, 128>}, {transform_indices = @transform_1, window_bounds = array<i64: 128, 128>}, {transform_indices = @transform_2, window_bounds = array<i64: 1, 128>}, {transform_indices = @transform_3, window_bounds = array<i64: 16, 128>}, {transform_indices = @transform_4, window_bounds = array<i64: 128, 128>}, {transform_indices = @transform_5, window_bounds = array<i64: 16, 128>}]} {
    %c0_i32 = arith.constant 0 : i32
    %0 = arith.cmpi eq, %arg2, %c0_i32 : i32
    %1 = arith.extui %0 : i1 to i32
    %c0_i32_0 = arith.constant 0 : i32
    %2 = arith.cmpi ne, %1, %c0_i32_0 : i32
    scf.if %2 {
      %c0_10 = arith.constant 0 : index
      %c0_11 = arith.constant 0 : index
      %12 = vector.load %arg6[%c0_10, %c0_11] : memref<16x128xf32, #tpu.memory_space<vmem>>, vector<16x128xf32>
      %c0_12 = arith.constant 0 : index
      %c0_13 = arith.constant 0 : index
      %13 = vector.load %arg7[%c0_12, %c0_13] : memref<128x128xf32, #tpu.memory_space<vmem>>, vector<128x128xf32>
      %cst_14 = arith.constant dense<0.000000e+00> : vector<16x128xf32>
      %14 = tpu.matmul %12, %13, %cst_14 {dimension_numbers = #tpu.dot_dimension_numbers<[1], [0], [0], [1], [0, 0, 1, 1], [], []>} : vector<16x128xf32>, vector<128x128xf32>, vector<16x128xf32> -> vector<16x128xf32>
      %c0_15 = arith.constant 0 : index
      %c0_16 = arith.constant 0 : index
      %15 = vector.load %arg5[%c0_15, %c0_16] : memref<1x128xf32, #tpu.memory_space<vmem>>, vector<1x128xf32>
      %16 = vector.broadcast %15 : vector<1x128xf32> to vector<16x128xf32>
      %17 = arith.addf %14, %16 : vector<16x128xf32>
      %c0_17 = arith.constant 0 : index
      %c0_18 = arith.constant 0 : index
      %18 = vector.load %arg9[%c0_17, %c0_18] : memref<16x128xf32, #tpu.memory_space<vmem>>, vector<16x128xf32>
      tpu.vector_store %arg9[%c0_17, %c0_18], %17 {strides = array<i32>} : memref<16x128xf32, #tpu.memory_space<vmem>>, vector<16x128xf32>,
    } else {
    }
    %c0 = arith.constant 0 : index
    %c0_1 = arith.constant 0 : index
    %3 = vector.load %arg9[%c0, %c0_1] : memref<16x128xf32, #tpu.memory_space<vmem>>, vector<16x128xf32>
    %c0_2 = arith.constant 0 : index
    %c0_3 = arith.constant 0 : index
    %4 = vector.load %arg3[%c0_2, %c0_3] : memref<16x128xf32, #tpu.memory_space<vmem>>, vector<16x128xf32>
    %c0_4 = arith.constant 0 : index
    %c0_5 = arith.constant 0 : index
    %5 = vector.load %arg4[%c0_4, %c0_5] : memref<128x128xf32, #tpu.memory_space<vmem>>, vector<128x128xf32>
    %cst = arith.constant dense<0.000000e+00> : vector<16x128xf32>
    %6 = tpu.matmul %4, %5, %cst {dimension_numbers = #tpu.dot_dimension_numbers<[1], [0], [0], [1], [0, 0, 1, 1], [], []>} : vector<16x128xf32>, vector<128x128xf32>, vector<16x128xf32> -> vector<16x128xf32>
    %7 = arith.addf %3, %6 : vector<16x128xf32>
    %c0_6 = arith.constant 0 : index
    %c0_7 = arith.constant 0 : index
    %8 = vector.load %arg9[%c0_6, %c0_7] : memref<16x128xf32, #tpu.memory_space<vmem>>, vector<16x128xf32>
    tpu.vector_store %arg9[%c0_6, %c0_7], %7 {strides = array<i32>} : memref<16x128xf32, #tpu.memory_space<vmem>>, vector<16x128xf32>,
    %c0_i32_8 = arith.constant 0 : i32
    %9 = arith.cmpi eq, %arg2, %c0_i32_8 : i32
    %10 = arith.extui %9 : i1 to i32
    %c0_i32_9 = arith.constant 0 : i32
    %11 = arith.cmpi ne, %10, %c0_i32_9 : i32
    scf.if %11 {
      %c0_10 = arith.constant 0 : index
      %c0_11 = arith.constant 0 : index
      %12 = vector.load %arg9[%c0_10, %c0_11] : memref<16x128xf32, #tpu.memory_space<vmem>>, vector<16x128xf32>
      %c0_12 = arith.constant 0 : index
      %c0_13 = arith.constant 0 : index
      %13 = vector.load %arg8[%c0_12, %c0_13] : memref<16x128xf32, #tpu.memory_space<vmem>>, vector<16x128xf32>
      tpu.vector_store %arg8[%c0_12, %c0_13], %12 {strides = array<i32>} : memref<16x128xf32, #tpu.memory_space<vmem>>, vector<16x128xf32>,
    } else {
    }
    return
  }
  func.func @transform_0(%arg0: i32, %arg1: i32, %arg2: i32) -> (i32, i32) {
    %c0_i32 = arith.constant 0 : i32
    return %arg0, %arg2 : i32, i32
  }
  func.func @transform_1(%arg0: i32, %arg1: i32, %arg2: i32) -> (i32, i32) {
    %c0_i32 = arith.constant 0 : i32
    return %arg2, %arg1 : i32, i32
  }
  func.func @transform_2(%arg0: i32, %arg1: i32, %arg2: i32) -> (i32, i32) {
    %c0_i32 = arith.constant 0 : i32
    %c0_i32_0 = arith.constant 0 : i32
    return %c0_i32, %arg1 : i32, i32
  }
  func.func @transform_3(%arg0: i32, %arg1: i32, %arg2: i32) -> (i32, i32) {
    %c0_i32 = arith.constant 0 : i32
    %c0_i32_0 = arith.constant 0 : i32
    return %arg0, %c0_i32 : i32, i32
  }
  func.func @transform_4(%arg0: i32, %arg1: i32, %arg2: i32) -> (i32, i32) {
    %c0_i32 = arith.constant 0 : i32
    %c0_i32_0 = arith.constant 0 : i32
    return %c0_i32, %arg1 : i32, i32
  }
  func.func @transform_5(%arg0: i32, %arg1: i32, %arg2: i32) -> (i32, i32) {
    %c0_i32 = arith.constant 0 : i32
    return %arg0, %arg1 : i32, i32
  }
}

</mosaic_0001>

<llo_original>
// kernel: tpu_custom_call.1
$region0: #{tpu_custom_call.1}
  #allocation0 [shape = 'u32[]', space=smem, size = 0x4, offset = 0x4, fixed_abs, tag = 'smem constant byte address 0x4 - core index']
  #allocation1 [shape = 'u32[72,128]{1,0:T(1,128)}', space=vmem, size = 0x9000, scoped, tag = 'internal scratch']
  #allocation2 [shape = 'f32[16,128]{1,0:T(8,128)}', space=vmem, size = 0x2000, scoped, tag = 'scratch operand']
  %s0 = inlined_call_operand.hbm [shape: f32[16,128], index: 0, kind: input, shape index: {}]
  %s1 = inlined_call_operand.hbm [shape: f32[128,128], index: 1, kind: input, shape index: {}]
  %s2 = inlined_call_operand.vmem [shape: f32[1,128], index: 2, kind: input, shape index: {}]
  %s3 = inlined_call_operand.hbm [shape: f32[16,128], index: 3, kind: input, shape index: {}]
  %s4 = inlined_call_operand.hbm [shape: f32[128,128], index: 4, kind: input, shape index: {}]
  %s5 = inlined_call_operand.hbm [shape: f32[16,128], index: 5, kind: output, shape index: {}]
  %s6 = sld [smem:[#allocation0]]
  $region54: #{tpu_custom_call.1} parent=0
    _
  %s8 = ssub.s32 1, %s6
  %s9 = scalar_select 0, %s8, %s6
  $region1: #{tpu_custom_call.1} parent=0
    #allocation3 [shape = 'u8[8192]{0}', space=vmem, size = 0x2000, scoped, tag = 'input window, operand 0, single buffered']
    #allocation4 [shape = 's32[1]{0}', space=sflag, size = 0x4, scoped, tag = 'scoped memory for tpu_custom_call.1']
    #allocation5 [shape = 's32[1]{0}', space=sflag, size = 0x4, scoped, tag = 'scoped memory for tpu_custom_call.1']
    #allocation6 [shape = 'u8[65536]{0}', space=vmem, size = 0x10000, scoped, tag = 'input window, operand 1, single buffered']
    #allocation7 [shape = 's32[1]{0}', space=sflag, size = 0x4, scoped, tag = 'scoped memory for tpu_custom_call.1']
    #allocation8 [shape = 'u8[8192]{0}', space=vmem, size = 0x2000, scoped, tag = 'input window, operand 3, single buffered']
    #allocation9 [shape = 'u8[65536]{0}', space=vmem, size = 0x10000, scoped, tag = 'input window, operand 4, single buffered']
    #allocation10 [shape = 's32[1]{0}', space=sflag, size = 0x4, scoped, tag = 'scoped memory for tpu_custom_call.1']
    #allocation11 [shape = 'u8[8192]{0}', space=vmem, size = 0x2000, scoped, tag = 'output window, operand 0, single buffered']
    %10 = vsyncpa [#allocation4], 0
    %11 = vsyncpa [#allocation7], 0
    %12 = vsyncpa [#allocation10], 0
    %13 = vsyncpa [#allocation5], 0
    // Predicated region
    $region2: #{tpu_custom_call.1} parent=1 // pred_check
      _
    $region3: #{tpu_custom_call.1} parent=1 // pred_check_branch
      %15 = sbr.rel (0) target = $region5
    $region4: #{tpu_custom_call.1} parent=1 // pred_region
      %17 = vsyncadd [#allocation4], 0
      %s18 = sshll.u32 %s0, 4
      %s19 = int_to_ptr.hbm [resolvable:$true] %s18
      %s20 = sshll.u32 [#allocation3], 4
      %s21 = int_to_ptr.vmem [resolvable:$true] %s20
      %26 = dma.hbm_to_vmem [thread:$0]  %s19, 256, %s21, [#allocation4], 128, 128, 8
    $region5: #{tpu_custom_call.1} parent=1 // pred_fallthru
      _
    // Predicated region
    $region6: #{tpu_custom_call.1} parent=1 // pred_check
      _
    $region7: #{tpu_custom_call.1} parent=1 // pred_check_branch
      %28 = sbr.rel (0) target = $region9
    $region8: #{tpu_custom_call.1} parent=1 // pred_region
      %30 = vsyncadd [#allocation7], 0
      %s31 = sshll.u32 %s1, 4
      %s32 = int_to_ptr.hbm [resolvable:$true] %s31
      %s33 = sshll.u32 [#allocation6], 4
      %s34 = int_to_ptr.vmem [resolvable:$true] %s33
      %39 = dma.hbm_to_vmem [thread:$0]  %s32, 2048, %s34, [#allocation7], 128, 128, 8
    $region9: #{tpu_custom_call.1} parent=1 // pred_fallthru
      _
    // Predicated region
    $region10: #{tpu_custom_call.1} parent=1 // pred_check
      _
    $region11: #{tpu_custom_call.1} parent=1 // pred_check_branch
      %41 = sbr.rel (0) target = $region13
    $region12: #{tpu_custom_call.1} parent=1 // pred_region
      _
    $region13: #{tpu_custom_call.1} parent=1 // pred_fallthru
      _
    // Predicated region
    $region14: #{tpu_custom_call.1} parent=1 // pred_check
      _
    $region15: #{tpu_custom_call.1} parent=1 // pred_check_branch
      %43 = sbr.rel (0) target = $region17
    $region16: #{tpu_custom_call.1} parent=1 // pred_region
      %45 = vsyncadd [#allocation7], 0
      %s46 = sshll.u32 %s3, 4
      %s47 = int_to_ptr.hbm [resolvable:$true] %s46
      %s48 = sshll.u32 [#allocation8], 4
      %s49 = int_to_ptr.vmem [resolvable:$true] %s48
      %54 = dma.hbm_to_vmem [thread:$0]  %s47, 256, %s49, [#allocation7], 128, 128, 8
    $region17: #{tpu_custom_call.1} parent=1 // pred_fallthru
      _
    // Predicated region
    $region18: #{tpu_custom_call.1} parent=1 // pred_check
      _
    $region19: #{tpu_custom_call.1} parent=1 // pred_check_branch
      %56 = sbr.rel (0) target = $region21
    $region20: #{tpu_custom_call.1} parent=1 // pred_region
      %58 = vsyncadd [#allocation10], 0
      %s59 = sshll.u32 %s4, 4
      %s60 = int_to_ptr.hbm [resolvable:$true] %s59
      %s61 = sshll.u32 [#allocation9], 4
      %s62 = int_to_ptr.vmem [resolvable:$true] %s61
      %67 = dma.hbm_to_vmem [thread:$0]  %s60, 2048, %s62, [#allocation10], 128, 128, 8
    $region21: #{tpu_custom_call.1} parent=1 // pred_fallthru
      _
    // Predicated region
    $region22: #{tpu_custom_call.1} parent=1 // pred_check
      _
    $region23: #{tpu_custom_call.1} parent=1 // pred_check_branch
      %69 = sbr.rel (0) target = $region25
    $region24: #{tpu_custom_call.1} parent=1 // pred_region
      %71 = dma.done [#allocation4], 256
    $region25: #{tpu_custom_call.1} parent=1 // pred_fallthru
      _
    // Predicated region
    $region26: #{tpu_custom_call.1} parent=1 // pred_check
      _
    $region27: #{tpu_custom_call.1} parent=1 // pred_check_branch
      %73 = sbr.rel (0) target = $region29
    $region28: #{tpu_custom_call.1} parent=1 // pred_region
      %75 = dma.done [#allocation7], 2048
    $region29: #{tpu_custom_call.1} parent=1 // pred_fallthru
      _
    // Predicated region
    $region30: #{tpu_custom_call.1} parent=1 // pred_check
      _
    $region31: #{tpu_custom_call.1} parent=1 // pred_check_branch
      %77 = sbr.rel (0) target = $region33
    $region32: #{tpu_custom_call.1} parent=1 // pred_region
      %79 = dma.done [#allocation7], 256
    $region33: #{tpu_custom_call.1} parent=1 // pred_fallthru
      _
    // Predicated region
    $region34: #{tpu_custom_call.1} parent=1 // pred_check
      _
    $region35: #{tpu_custom_call.1} parent=1 // pred_check_branch
      %81 = sbr.rel (0) target = $region37
    $region36: #{tpu_custom_call.1} parent=1 // pred_region
      %83 = dma.done [#allocation10], 2048
    $region37: #{tpu_custom_call.1} parent=1 // pred_fallthru
      _
    %p84 = scmp.eq.s32.totalorder 0, 0
    // Predicated region
    $region38: #{tpu_custom_call.1} parent=1 // pred_check
      %p85 = pneg %p84
    $region39: #{tpu_custom_call.1} parent=1 // pred_check_branch
      %87 = sbr.rel (%p85) target = $region41
    $region40: #{tpu_custom_call.1} parent=1 // pred_region
      %v88 = vld [vmem:[#allocation8] sm:$0xff]
      %v89 = vld [vmem:[#allocation8 + $0x8] sm:$0xff]
      %v90 = vld [vmem:[#allocation9] sm:$0xff]
      %v91 = vld [vmem:[#allocation9 + $0x8] sm:$0xff]
      %v92 = vld [vmem:[#allocation9 + $0x10] sm:$0xff]
      %v93 = vld [vmem:[#allocation9 + $0x18] sm:$0xff]
      %v94 = vld [vmem:[#allocation9 + $0x20] sm:$0xff]
      %v95 = vld [vmem:[#allocation9 + $0x28] sm:$0xff]
      %v96 = vld [vmem:[#allocation9 + $0x30] sm:$0xff]
      %v97 = vld [vmem:[#allocation9 + $0x38] sm:$0xff]
      %v98 = vld [vmem:[#allocation9 + $0x40] sm:$0xff]
      %v99 = vld [vmem:[#allocation9 + $0x48] sm:$0xff]
      %v100 = vld [vmem:[#allocation9 + $0x50] sm:$0xff]
      %v101 = vld [vmem:[#allocation9 + $0x58] sm:$0xff]
      %v102 = vld [vmem:[#allocation9 + $0x60] sm:$0xff]
      %v103 = vld [vmem:[#allocation9 + $0x68] sm:$0xff]
      %v104 = vld [vmem:[#allocation9 + $0x70] sm:$0xff]
      %v105 = vld [vmem:[#allocation9 + $0x78] sm:$0xff]
      %v106 = vld [vmem:[%s2] sm:$0x1]
      %v108 = vperm.slane %v106, 0
      %110 = vmatpush.msra.mxu0 %v105
      %111 = vmatpush.msra.mxu0 %v104
      %112 = vmatpush.msra.mxu0 %v103
      %113 = vmatpush.msra.mxu0 %v102
      %114 = vmatpush.msra.mxu0 %v101
      %115 = vmatpush.msra.mxu0 %v100
      %116 = vmatpush.msra.mxu0 %v99
      %117 = vmatpush.msra.mxu0 %v98
      %118 = vmatpush.msra.mxu0 %v97
      %119 = vmatpush.msra.mxu0 %v96
      %120 = vmatpush.msra.mxu0 %v95
      %121 = vmatpush.msra.mxu0 %v94
      %122 = vmatpush.msra.mxu0 %v93
      %123 = vmatpush.msra.mxu0 %v92
      %124 = vmatpush.msra.mxu0 %v91
      %125 = vmatpush.msra.mxu0 %v90
      %126 = vmatmul.f32.gmra.mxu0 %v88
      %v127 = vpop.f32.mrf.mxu0
      %v128 = vadd.f32 %v108, %v127
      %129 = vmatmul.f32.gmra.mxu0 %v89
      %v130 = vpop.f32.mrf.mxu0
      %v131 = vadd.f32 %v108, %v130
      %132 = vdwg.mxu0
      %133 = vst [vmem:[#allocation2] sm:$0xff] %v128
      %134 = vst [vmem:[#allocation2 + $0x8] sm:$0xff] %v131
    $region41: #{tpu_custom_call.1} parent=1 // pred_fallthru
      _
    %v135 = vld [vmem:[#allocation2] sm:$0xff]
    %v136 = vld [vmem:[#allocation2 + $0x8] sm:$0xff]
    %v137 = vld [vmem:[#allocation3] sm:$0xff]
    %v138 = vld [vmem:[#allocation3 + $0x8] sm:$0xff]
    %v139 = vld [vmem:[#allocation6] sm:$0xff]
    %v140 = vld [vmem:[#allocation6 + $0x8] sm:$0xff]
    %v141 = vld [vmem:[#allocation6 + $0x10] sm:$0xff]
    %v142 = vld [vmem:[#allocation6 + $0x18] sm:$0xff]
    %v143 = vld [vmem:[#allocation6 + $0x20] sm:$0xff]
    %v144 = vld [vmem:[#allocation6 + $0x28] sm:$0xff]
    %v145 = vld [vmem:[#allocation6 + $0x30] sm:$0xff]
    %v146 = vld [vmem:[#allocation6 + $0x38] sm:$0xff]
    %v147 = vld [vmem:[#allocation6 + $0x40] sm:$0xff]
    %v148 = vld [vmem:[#allocation6 + $0x48] sm:$0xff]
    %v149 = vld [vmem:[#allocation6 + $0x50] sm:$0xff]
    %v150 = vld [vmem:[#allocation6 + $0x58] sm:$0xff]
    %v151 = vld [vmem:[#allocation6 + $0x60] sm:$0xff]
    %v152 = vld [vmem:[#allocation6 + $0x68] sm:$0xff]
    %v153 = vld [vmem:[#allocation6 + $0x70] sm:$0xff]
    %v154 = vld [vmem:[#allocation6 + $0x78] sm:$0xff]
    %155 = vmatpush.msra.mxu0 %v154
    %156 = vmatpush.msra.mxu0 %v153
    %157 = vmatpush.msra.mxu0 %v152
    %158 = vmatpush.msra.mxu0 %v151
    %159 = vmatpush.msra.mxu0 %v150
    %160 = vmatpush.msra.mxu0 %v149
    %161 = vmatpush.msra.mxu0 %v148
    %162 = vmatpush.msra.mxu0 %v147
    %163 = vmatpush.msra.mxu0 %v146
    %164 = vmatpush.msra.mxu0 %v145
    %165 = vmatpush.msra.mxu0 %v144
    %166 = vmatpush.msra.mxu0 %v143
    %167 = vmatpush.msra.mxu0 %v142
    %168 = vmatpush.msra.mxu0 %v141
    %169 = vmatpush.msra.mxu0 %v140
    %170 = vmatpush.msra.mxu0 %v139
    %171 = vmatmul.f32.gmra.mxu0 %v137
    %v172 = vpop.f32.mrf.mxu0
    %v173 = vadd.f32 0.0, %v172
    %174 = vmatmul.f32.gmra.mxu0 %v138
    %v175 = vpop.f32.mrf.mxu0
    %v176 = vadd.f32 0.0, %v175
    %177 = vdwg.mxu0
    %v178 = vadd.f32 %v135, %v173
    %v179 = vadd.f32 %v136, %v176
    %180 = vst [vmem:[#allocation2] sm:$0xff] %v178
    %181 = vst [vmem:[#allocation2 + $0x8] sm:$0xff] %v179
    // Predicated region
    $region42: #{tpu_custom_call.1} parent=1 // pred_check
      %p182 = pneg %p84
    $region43: #{tpu_custom_call.1} parent=1 // pred_check_branch
      %184 = sbr.rel (%p182) target = $region45
    $region44: #{tpu_custom_call.1} parent=1 // pred_region
      %v185 = vld [vmem:[#allocation2] sm:$0xff]
      %v186 = vld [vmem:[#allocation2 + $0x8] sm:$0xff]
      %187 = vst [vmem:[#allocation11] sm:$0xff] %v185
      %188 = vst [vmem:[#allocation11 + $0x8] sm:$0xff] %v186
    $region45: #{tpu_custom_call.1} parent=1 // pred_fallthru
      _
    // Predicated region
    $region46: #{tpu_custom_call.1} parent=1 // pred_check
      _
    $region47: #{tpu_custom_call.1} parent=1 // pred_check_branch
      %190 = sbr.rel (0) target = $region49
    $region48: #{tpu_custom_call.1} parent=1 // pred_region
      %192 = vsyncadd [#allocation5], 0
      %s193 = sshll.u32 [#allocation11], 4
      %s194 = int_to_ptr.vmem [resolvable:$true] %s193
      %s195 = sshll.u32 %s5, 4
      %s196 = int_to_ptr.hbm [resolvable:$true] %s195
      %201 = dma.vmem_to_hbm [thread:$0]  %s194, 256, %s196, [#allocation5], 128, 128, 8
    $region49: #{tpu_custom_call.1} parent=1 // pred_fallthru
      _
    // Predicated region
    $region50: #{tpu_custom_call.1} parent=1 // pred_check
      _
    $region51: #{tpu_custom_call.1} parent=1 // pred_check_branch
      %203 = sbr.rel (0) target = $region53
    $region52: #{tpu_custom_call.1} parent=1 // pred_region
      %205 = dma.done [#allocation5], 256
    $region53: #{tpu_custom_call.1} parent=1 // pred_fallthru
      _
    %206 = vsyncpa [#allocation4], 1
    %207 = vsyncpa [#allocation7], 1
    %208 = vsyncpa [#allocation10], 1
    %209 = vsyncpa [#allocation5], 1

</llo_original>
